<compile_context>
chip_gen: v5e
topology: v5e:2x2
jax: 0.10.0
libtpu: 0.0.40
codegen_flags: <defaults>
</compile_context>

<pallas_src>
import functools

import jax
import jax.numpy as jnp
from jax.experimental import pallas as pl
from jax.experimental.pallas import tpu as pltpu


# ----------------------------------------------------------------------------
# Sizing helpers
# ----------------------------------------------------------------------------
def _vmem_capacity_bytes():
    """Physical VMEM of the current chip (v5e/v6e: 128 MiB, v7x: 64 MiB/TC)."""
    try:
        info = pltpu.get_tpu_info()
        cap = getattr(info, "vmem_capacity_bytes", None)
        if cap:
            return int(cap)
    except Exception:
        pass
    return 64 << 20  # conservative default (v7x per-TensorCore VMEM)


def _pick_batch_tile(batch, bytes_per_row, target_bytes):
    """Pick a batch tile TB that (a) satisfies the TPU block rule for the
    second-minor dim (TB % 8 == 0 or TB == batch), (b) keeps the per-step
    footprint around `target_bytes`, (c) prefers >= 2 grid steps (pipelining,
    v7x 2-TC sharding)."""
    if batch < 8 or batch % 8 != 0:
        return batch                       # full-batch block is always legal
    best = 8
    tb = 8
    while tb <= batch:
        if batch % tb == 0 and tb * bytes_per_row <= target_bytes:
            best = tb
        tb += 8
    if best == batch and batch >= 16 and (batch // 2) % 8 == 0:
        best = batch // 2                  # keep >= 2 grid steps
    return best


# ----------------------------------------------------------------------------
# Kernel 1: norm1 + multi-head self-attention + proj + residual-double
#   grid = (batch_tiles,).  All heads are handled inside one grid step:
#   norm1/transpose computed once, one lane-dense QKV matmul, one K=D output
#   projection; per-head ctx goes into hd-slices of a bf16 VMEM scratch.
# ----------------------------------------------------------------------------
def _attn_kernel(x_ref, g1_ref, b1_ref, wqkv_ref, wp_ref, bp_ref, o_ref,
                 ctx_ref, *, eps, num_heads):
    M, TB, N, D = x_ref.shape
    S = M * N
    H = num_heads
    hd = D // H

    # (M, TB, N, D) -> (TB, M*N, D): leading-dim transpose + collapse; token
    # order matches torch.cat(inputs, dim=1) (modality-major).
    x = jnp.transpose(x_ref[...], (1, 0, 2, 3)).reshape(TB, S, D)

    # norm1 in f32 — computed exactly once per batch tile.
    mu = jnp.mean(x, axis=-1, keepdims=True)
    var = jnp.mean((x - mu) ** 2, axis=-1, keepdims=True)
    xn = (x - mu) * jax.lax.rsqrt(var + eps) * g1_ref[...] + b1_ref[...]
    xb = xn.astype(jnp.bfloat16).reshape(TB * S, D)          # bf16 MXU input

    # Single lane-dense QKV projection: (TB*S, D) @ (D, 3D), f32 accumulation.
    # The softmax 1/sqrt(hd) scale is folded into the q panel (wrapper side).
    qkv = jnp.dot(xb, wqkv_ref[...], preferred_element_type=jnp.float32)
    q = qkv[:, :D].reshape(TB, S, D).astype(jnp.bfloat16)
    k = qkv[:, D:2 * D].reshape(TB, S, D).astype(jnp.bfloat16)
    v = qkv[:, 2 * D:].reshape(TB, S, D).astype(jnp.bfloat16)

    # Per-head attention, static unroll (H is small); each head writes its
    # hd-slice of the bf16 ctx scratch.
    # TODO(synk): stream K/V blocks with an online softmax (flash style) for
    # long S so the (TB, S, S) scores never materialize in VMEM.
    for h in range(H):
        sl = slice(h * hd, (h + 1) * hd)
        s = jnp.einsum("bqd,bkd->bqk", q[:, :, sl], k[:, :, sl],
                       preferred_element_type=jnp.float32)
        s = s - jnp.max(s, axis=-1, keepdims=True)
        p = jnp.exp(s)
        p = p * pl.reciprocal(jnp.sum(p, axis=-1, keepdims=True), approx=True)
        ctx_h = jnp.einsum("bqk,bkd->bqd", p.astype(jnp.bfloat16), v[:, :, sl],
                           preferred_element_type=jnp.float32)
        ctx_ref[:, :, sl] = ctx_h.astype(jnp.bfloat16)

    # One K=D output projection for all heads (== concat(ctx_h) @ Wp), bias,
    # then x = attn_out + dropout1(attn_out); dropout identity in eval -> 2x.
    proj = jnp.dot(ctx_ref[...].reshape(TB * S, D), wp_ref[...],
                   preferred_element_type=jnp.float32)
    o = proj.reshape(TB, S, D) + bp_ref[...]
    o_ref[...] = o + o


def transformer_attn_block(inputs, params, num_heads):
    """Attention path of the TransformerEncoderLayer on cat(inputs, dim=1).

    NOTE: MoE_Retriever.forward discards this result; only call it when the
    intermediate is needed (skipping it also skips a dead HBM writeback)."""
    M, B, N, D = inputs.shape
    assert D % num_heads == 0, "hidden_dim must be divisible by num_heads"
    hd = D // num_heads
    S = M * N
    scale = hd ** -0.5

    # bf16 MXU weights: fuse Q/K/V into one (D, 3D) panel (lane-dense N) and
    # fold the softmax scale into the q columns.  Tiny, constant-folded by XLA.
    wqkv = jnp.concatenate(
        [params["wq"] * scale, params["wk"], params["wv"]], axis=1
    ).astype(jnp.bfloat16)                                    # (D, 3D)
    wp = params["wp"].astype(jnp.bfloat16)                    # (D, D)

    # Generation-aware tiling: account for the S^2 score/prob intermediates
    # (the term that blows v7x's 64 MiB first) and clamp to physical VMEM.
    vmem_cap = _vmem_capacity_bytes()
    row_bytes = (16 * S * D                       # double-buffered in/out blocks
                 + 34 * S * D                     # xn/qkv/q/k/v/ctx/proj/o
                 + min(num_heads, 2) * 10 * S * S)  # live score/prob tensors
    budget = int(0.45 * vmem_cap)
    TB = _pick_batch_tile(B, row_bytes, target_bytes=budget)

    est = TB * row_bytes + 2 * (4 * D * D) * 2    # + bf16 weight panels (dbuf)
    vmem_limit = int(min(0.85 * vmem_cap, max(int(1.4 * est), 16 << 20)))

    kernel = functools.partial(_attn_kernel, eps=1e-5, num_heads=num_heads)

    return pl.pallas_call(
        kernel,
        out_shape=jax.ShapeDtypeStruct((B, S, D), jnp.float32),
        grid=(B // TB,),
        in_specs=[
            pl.BlockSpec((M, TB, N, D), lambda b: (0, b, 0, 0)),  # inputs
            pl.BlockSpec((1, D), lambda b: (0, 0)),               # gamma1
            pl.BlockSpec((1, D), lambda b: (0, 0)),               # beta1
            pl.BlockSpec((D, 3 * D), lambda b: (0, 0)),           # Wqkv (scaled q)
            pl.BlockSpec((D, D), lambda b: (0, 0)),               # Wp
            pl.BlockSpec((1, D), lambda b: (0, 0)),               # proj bias
        ],
        out_specs=pl.BlockSpec((TB, S, D), lambda b: (b, 0, 0)),
        scratch_shapes=[pltpu.VMEM((TB, S, D), jnp.bfloat16)],    # per-head ctx
        compiler_params=pltpu.CompilerParams(
            dimension_semantics=("parallel",),
            vmem_limit_bytes=vmem_limit),
    )(inputs, params["gamma1"], params["beta1"], wqkv, wp, params["bp"])


# ----------------------------------------------------------------------------
# Kernel 2: weighted intra/inter modality reduction (the module's return value)
#   Lane-dense: (N, D) flattened to N*D; pure HBM-bandwidth-bound.
# ----------------------------------------------------------------------------
def _weighted_sum_kernel(x_ref, o_ref, *, num_intra, intra_w, inter_w):
    M = x_ref.shape[0]
    acc = jnp.zeros(o_ref.shape, jnp.float32)
    for m in range(M):                     # static unroll over modalities (small)
        w = intra_w if m < num_intra else inter_w
        acc = acc + w * x_ref[m]
    o_ref[...] = acc


def moe_retriever_output(inputs, num_intra, num_inter, inter_weight):
    M, B, N, D = inputs.shape
    F = N * D
    xf = inputs.reshape(M, B, F)           # contiguous trailing-dim collapse: free
    intra_w = (1.0 - inter_weight) / num_intra
    inter_w = inter_weight / num_inter

    # HBM-bound: big tiles (~12 MiB input side) amortize the ~0.35us/step
    # pipeline overhead; clamp to the chip's VMEM (64 MiB/TC on v7x).
    vmem_cap = _vmem_capacity_bytes()
    row_bytes = 2 * (M + 1) * F * 4        # double-buffered input + output rows
    target = min(12 << 20, int(0.4 * vmem_cap))
    TB = _pick_batch_tile(B, row_bytes, target_bytes=target)

    # Guarantee >= 2 grid steps (load/compute/store overlap; both v7x TCs):
    # if the batch axis gives a single step, split the lane-dense feature axis.
    TF = F
    if B // TB < 2 and F % 256 == 0:
        TF = F // 2

    est = 2 * (M + 1) * TB * TF * 4
    vmem_limit = int(min(0.85 * vmem_cap, max(int(1.4 * est), 16 << 20)))

    kernel = functools.partial(_weighted_sum_kernel, num_intra=num_intra,
                               intra_w=intra_w, inter_w=inter_w)
    out = pl.pallas_call(
        kernel,
        out_shape=jax.ShapeDtypeStruct((B, F), jnp.float32),
        grid=(B // TB, F // TF),
        in_specs=[pl.BlockSpec((M, TB, TF), lambda b, f: (0, b, f))],
        out_specs=pl.BlockSpec((TB, TF), lambda b, f: (b, f)),
        compiler_params=pltpu.CompilerParams(
            dimension_semantics=("parallel", "parallel"),
            vmem_limit_bytes=vmem_limit),
    )(xf)
    return out.reshape(B, N, D)


# ----------------------------------------------------------------------------
# Full module forward
# ----------------------------------------------------------------------------
def moe_retriever_forward(inputs, params=None, *, num_heads=2, num_intra=1,
                          num_inter=1, inter_weight=0.5,
                          run_encoder_layer=False):
    """Returns (out, attn).  `out` is MoE_Retriever.forward's return value.

    The encoder layer's result is discarded by the reference module, so it is
    skipped by default (saves its compute and the dead HBM writeback); pass
    run_encoder_layer=True to also execute the attention kernel."""
    out = moe_retriever_output(inputs, num_intra, num_inter, inter_weight)
    attn = None
    if run_encoder_layer:
        # TODO(synk): FMoETransformerMLP (sparse-MoE expert MLP after norm2) has
        # no definition in the provided source; its output is also discarded.
        attn = transformer_attn_block(inputs, params, num_heads)
    return out, attn


# ----------------------------------------------------------------------------
# Pure-JAX references (for correctness checks)
# ----------------------------------------------------------------------------
def _ref_output(inputs, num_intra, num_inter, inter_weight):
    intra_w = (1.0 - inter_weight) / num_intra
    inter_w = inter_weight / num_inter
    return (intra_w * jnp.sum(inputs[:num_intra], axis=0)
            + inter_w * jnp.sum(inputs[num_intra:], axis=0))


def _ref_attn_block(inputs, params, num_heads):
    """Pure-JAX reference mirroring the kernel's bf16 MXU-input casts and the
    scale-folded-into-wq numerics."""
    M, B, N, D = inputs.shape
    hd = D // num_heads
    S = M * N
    scale = hd ** -0.5
    x = jnp.transpose(inputs, (1, 0, 2, 3)).reshape(B, S, D)
    mu = jnp.mean(x, axis=-1, keepdims=True)
    var = jnp.mean((x - mu) ** 2, axis=-1, keepdims=True)
    xn = (x - mu) / jnp.sqrt(var + 1e-5) * params["gamma1"] + params["beta1"]
    xb = xn.astype(jnp.bfloat16)
    wq = (params["wq"] * scale).astype(jnp.bfloat16)
    wk = params["wk"].astype(jnp.bfloat16)
    wv = params["wv"].astype(jnp.bfloat16)
    wp = params["wp"].astype(jnp.bfloat16)
    q = jnp.dot(xb, wq, preferred_element_type=jnp.float32)
    k = jnp.dot(xb, wk, preferred_element_type=jnp.float32)
    v = jnp.dot(xb, wv, preferred_element_type=jnp.float32)
    q = q.reshape(B, S, num_heads, hd).transpose(0, 2, 1, 3).astype(jnp.bfloat16)
    k = k.reshape(B, S, num_heads, hd).transpose(0, 2, 1, 3).astype(jnp.bfloat16)
    v = v.reshape(B, S, num_heads, hd).transpose(0, 2, 1, 3).astype(jnp.bfloat16)
    attn = jnp.einsum("bhqd,bhkd->bhqk", q, k, preferred_element_type=jnp.float32)
    attn = jax.nn.softmax(attn, axis=-1)
    o = jnp.einsum("bhqk,bhkd->bhqd", attn.astype(jnp.bfloat16), v,
                   preferred_element_type=jnp.float32)
    o = o.transpose(0, 2, 1, 3).reshape(B, S, D)
    o = jnp.dot(o.astype(jnp.bfloat16), wp,
                preferred_element_type=jnp.float32) + params["bp"]
    return o + o


if __name__ == "__main__":
    # Small shapes consistent with the module:
    # (num_modalities, batch, num_patches, hidden_dim)
    num_modalities, batch, num_patches, hidden_dim = 2, 2, 8, 32
    num_heads = 2

    key = jax.random.PRNGKey(0)
    k_in, k_q, k_kv, k_p, k_pb = jax.random.split(key, 5)

    inputs = jax.random.normal(
        k_in, (num_modalities, batch, num_patches, hidden_dim), jnp.float32)

    D = hidden_dim
    # Weights stored as (in, out) so the kernel applies x @ W (PyTorch-like scale).
    wkv = jax.random.normal(k_kv, (D, 2 * D), jnp.float32) * (1.0 / jnp.sqrt(D))
    params = {
        "gamma1": jnp.ones((1, D), jnp.float32),
        "beta1": jnp.zeros((1, D), jnp.float32),
        "wq": jax.random.normal(k_q, (D, D), jnp.float32) * (1.0 / jnp.sqrt(D)),
        "wk": wkv[:, :D],
        "wv": wkv[:, D:],
        "wp": jax.random.normal(k_p, (D, D), jnp.float32) * (1.0 / jnp.sqrt(D)),
        "bp": jax.random.normal(k_pb, (1, D), jnp.float32) * 0.1,
    }

    out, attn = moe_retriever_forward(
        inputs, params, num_heads=num_heads, num_intra=1, num_inter=1,
        inter_weight=0.5, run_encoder_layer=True)
    out = jax.block_until_ready(out)
    attn = jax.block_until_ready(attn)

    # Correctness checks vs pure-JAX references.
    ref_out = _ref_output(inputs, num_intra=1, num_inter=1, inter_weight=0.5)
    ref_attn = _ref_attn_block(inputs, params, num_heads)

    assert out.shape == (batch, num_patches, hidden_dim)
    assert jnp.allclose(out, ref_out, atol=1e-5, rtol=1e-5)
    assert attn.shape == (batch, num_modalities * num_patches, hidden_dim)
    assert jnp.allclose(attn, ref_attn, atol=2e-2, rtol=2e-2)   # bf16 MXU path

    print("KERNEL_OK")
</pallas_src>

<mosaic_0001>
module attributes {stable_mosaic.version = 11 : i64} {
  func.func @_weighted_sum_kernel(%arg0: i32, %arg1: i32, %arg2: memref<2x2x128xf32, #tpu.memory_space<vmem>>, %arg3: memref<2x128xf32, #tpu.memory_space<vmem>>) attributes {dimension_semantics = [#tpu.dimension_semantics<parallel>, #tpu.dimension_semantics<parallel>], iteration_bounds = array<i64: 1, 2>, scalar_prefetch = 0 : i64, scratch_operands = 0 : i64, tpu.core_type = #tpu.core_type<tc>, window_params = [{transform_indices = @transform_0, window_bounds = array<i64: 2, 2, 128>}, {transform_indices = @transform_1, window_bounds = array<i64: 2, 128>}]} {
    %cst = arith.constant 0.000000e+00 : f32
    %0 = vector.broadcast %cst : f32 to vector<2x128xf32>
    %c0 = arith.constant 0 : index
    %c0_0 = arith.constant 0 : index
    %c0_1 = arith.constant 0 : index
    %1 = vector.load %arg2[%c0, %c0_0, %c0_1] : memref<2x2x128xf32, #tpu.memory_space<vmem>>, vector<1x2x128xf32>
    %2 = vector.shape_cast %1 : vector<1x2x128xf32> to vector<2x128xf32>
    %cst_2 = arith.constant 5.000000e-01 : f32
    %3 = vector.broadcast %cst_2 : f32 to vector<2x128xf32>
    %4 = arith.mulf %3, %2 : vector<2x128xf32>
    %5 = arith.addf %0, %4 : vector<2x128xf32>
    %c1 = arith.constant 1 : index
    %c0_3 = arith.constant 0 : index
    %c0_4 = arith.constant 0 : index
    %6 = vector.load %arg2[%c1, %c0_3, %c0_4] : memref<2x2x128xf32, #tpu.memory_space<vmem>>, vector<1x2x128xf32>
    %7 = vector.shape_cast %6 : vector<1x2x128xf32> to vector<2x128xf32>
    %cst_5 = arith.constant 5.000000e-01 : f32
    %8 = vector.broadcast %cst_5 : f32 to vector<2x128xf32>
    %9 = arith.mulf %8, %7 : vector<2x128xf32>
    %10 = arith.addf %5, %9 : vector<2x128xf32>
    %c0_6 = arith.constant 0 : index
    %c0_7 = arith.constant 0 : index
    %11 = vector.load %arg3[%c0_6, %c0_7] : memref<2x128xf32, #tpu.memory_space<vmem>>, vector<2x128xf32>
    tpu.vector_store %arg3[%c0_6, %c0_7], %10 {strides = array<i32>} : memref<2x128xf32, #tpu.memory_space<vmem>>, vector<2x128xf32>,
    return
  }
  func.func @transform_0(%arg0: i32, %arg1: i32) -> (i32, i32, i32) {
    %c0_i32 = arith.constant 0 : i32
    %c0_i32_0 = arith.constant 0 : i32
    return %c0_i32, %arg0, %arg1 : i32, i32, i32
  }
  func.func @transform_1(%arg0: i32, %arg1: i32) -> (i32, i32) {
    %c0_i32 = arith.constant 0 : i32
    return %arg0, %arg1 : i32, i32
  }
}

</mosaic_0001>

<llo_original>
// kernel: tpu_custom_call.1
$region0: #{tpu_custom_call.1}
  #allocation0 [shape = 'u32[]', space=smem, size = 0x4, offset = 0x4, fixed_abs, tag = 'smem constant byte address 0x4 - core index']
  #allocation1 [shape = 'u32[72,128]{1,0:T(1,128)}', space=vmem, size = 0x9000, scoped, tag = 'internal scratch']
  %s0 = inlined_call_operand.hbm [shape: f32[2,2,256], index: 0, kind: input, shape index: {}]
  %s1 = inlined_call_operand.hbm [shape: f32[2,256], index: 1, kind: output, shape index: {}]
  %s2 = sld [smem:[#allocation0]]
  $region41: #{tpu_custom_call.1} parent=0
    _
  %s4 = ssub.s32 1, %s2
  %s5 = scalar_select 0, %s4, %s2
  $region1: #{tpu_custom_call.1} parent=0
    #allocation2 [shape = 'u8[4096]{0}', space=vmem, size = 0x1000, scoped, tag = 'input window, operand 0']
    #allocation3 [shape = 's32[2]{0}', space=sflag, size = 0x8, scoped, tag = 'scoped memory for tpu_custom_call.1']
    #allocation4 [shape = 's32[2]{0}', space=sflag, size = 0x8, scoped, tag = 'scoped memory for tpu_custom_call.1']
    #allocation5 [shape = 'u8[2048]{0}', space=vmem, size = 0x800, scoped, tag = 'output window, operand 0']
    %6 = vsyncpa [#allocation3], 0
    %s7 = scalar_lea.sflag [#allocation3], 1
    %8 = vsyncpa %s7, 0
    %9 = vsyncpa [#allocation4], 0
    %s10 = scalar_lea.sflag [#allocation4], 1
    %11 = vsyncpa %s10, 0
    loop: start=0, step=1, limit=4
    $region2: #{tpu_custom_call.1} parent=1 // loop_pre_header
      _
    $region3: #{tpu_custom_call.1} parent=1 // loop_header
      %s13 = sphi 0, %s17
      %p14 = scmp.ge.s32.totalorder %s13, 4
      %s20 = sphi 0, %s32
      %s21 = sphi 0, %s28
      %s22 = sphi 0, %s20
      %s23 = sphi 0, %s21
      %s24 = sphi 0, %s22
      %s25 = sphi 0, %s23
      %s37 = sphi 0, %s39
      %s40 = sphi 0, %s37
      %s41 = sphi 0, %s40
      %s57 = sphi 0, %s41
      %s65 = sphi 0, %s67
      %s68 = sphi 0, %s65
      %s69 = sphi 0, %s68
      %s85 = sphi 0, %s69
    $region4: #{tpu_custom_call.1} parent=1 // loop_header_branch
      %16 = sbr.rel (%p14) target = $region8
    $region5: #{tpu_custom_call.1} parent=1 // loop_body
      %s18 = ssub.s32 %s13, 1
      %s19 = ssub.s32 %s13, 2
      %s26 = sadd.s32 1, %s21
      %p27 = scmp.ge.s32.totalorder %s26, 2
      %s28 = scalar_select %p27, 0, %s26
      %s29 = sadd.s32 1, %s20
      %s30 = scalar_select %p27, %s29, %s20
      %p31 = scmp.ge.s32.totalorder %s30, 1
      %s32 = scalar_select %p31, 0, %s30
      %s33 = ssub.s32 %s20, %s32
      %s34 = ssub.s32 %s21, %s28
      %s35 = sor.u32 %s33, %s34
      %p36 = scmp.eq.s32.totalorder %s35, 0
      %s38 = sadd.s32 %s37, 1
      %s39 = scalar_select %p36, %s37, %s38
      %p42 = pneg %p36
      %p43 = scmp.eq.s32.totalorder %s13, 1
      %p44 = por %p42, %p43
      %p45 = scmp.ne.s32.totalorder %s37, %s40
      %p46 = scmp.eq.s32.totalorder %s13, 0
      %p47 = por %p45, %p46
      %p48 = scmp.ne.s32.totalorder %s37, %s40
      %p49 = scmp.eq.s32.totalorder %s18, 1
      %p50 = por %p48, %p49
      %p51 = scmp.ne.s32.totalorder %s40, %s41
      %p52 = scmp.eq.s32.totalorder %s18, 0
      %p53 = por %p51, %p52
      %p54 = scmp.ne.s32.totalorder %s40, %s41
      %p55 = scmp.eq.s32.totalorder %s19, 1
      %p56 = por %p54, %p55
      %p58 = scmp.ne.s32.totalorder %s41, %s57
      %p59 = scmp.eq.s32.totalorder %s19, 0
      %p60 = por %p58, %p59
      %s61 = ssub.s32 %s20, %s32
      %s62 = ssub.s32 %s21, %s28
      %s63 = sor.u32 %s61, %s62
      %p64 = scmp.eq.s32.totalorder %s63, 0
      %s66 = sadd.s32 %s65, 1
      %s67 = scalar_select %p64, %s65, %s66
      %p70 = pneg %p64
      %p71 = scmp.eq.s32.totalorder %s13, 1
      %p72 = por %p70, %p71
      %p73 = scmp.ne.s32.totalorder %s65, %s68
      %p74 = scmp.eq.s32.totalorder %s13, 0
      %p75 = por %p73, %p74
      %p76 = scmp.ne.s32.totalorder %s65, %s68
      %p77 = scmp.eq.s32.totalorder %s18, 1
      %p78 = por %p76, %p77
      %p79 = scmp.ne.s32.totalorder %s68, %s69
      %p80 = scmp.eq.s32.totalorder %s18, 0
      %p81 = por %p79, %p80
      %p82 = scmp.ne.s32.totalorder %s68, %s69
      %p83 = scmp.eq.s32.totalorder %s19, 1
      %p84 = por %p82, %p83
      %p86 = scmp.ne.s32.totalorder %s69, %s85
      %p87 = scmp.eq.s32.totalorder %s19, 0
      %p88 = por %p86, %p87
      %p89 = scmp.le.s32.totalorder 1, %s13
      %p90 = scmp.lt.s32.totalorder %s13, 3
      %p91 = pnand %p89, %p90
      %p92 = pneg %p91
      // Predicated region
      $region9: #{tpu_custom_call.1} parent=5 // pred_check
        _
      $region10: #{tpu_custom_call.1} parent=5 // pred_check_branch
        %94 = sbr.rel (%p91) target = $region12
      $region11: #{tpu_custom_call.1} parent=5 // pred_region
        %s95 = ssub.s32 %s13, 1
      $region12: #{tpu_custom_call.1} parent=5 // pred_fallthru
        _
      %p96 = scmp.lt.s32.totalorder %s13, 2
      // Predicated region
      $region13: #{tpu_custom_call.1} parent=5 // pred_check
        %p97 = pneg %p96
      $region14: #{tpu_custom_call.1} parent=5 // pred_check_branch
        %99 = sbr.rel (%p97) target = $region16
      $region15: #{tpu_custom_call.1} parent=5 // pred_region
        // Predicated region
        $region17: #{tpu_custom_call.1} parent=15 // pred_check
          %p100 = pneg %p47
        $region18: #{tpu_custom_call.1} parent=15 // pred_check_branch
          %102 = sbr.rel (%p100) target = $region20
        $region19: #{tpu_custom_call.1} parent=15 // pred_region
          %s103 = sand.u32 %s37, 1
          %s104 = scalar_lea.sflag [#allocation3], %s103
          %s105 = sand.u32 %s37, 1
          %s106 = smul.addr %s105, 4
          %s107 = scalar_lea.vmem [#allocation2], %s106
          %109 = vsyncadd %s104, 0
          %s110 = smul.addr %s20, 2
          %s111 = sadd.s32 %s21, %s110
          %s112 = smul.addr %s111, 2
          %s113 = scalar_lea.hbm %s0, %s112
          %s114 = sshll.u32 %s113, 4
          %s115 = int_to_ptr.hbm [resolvable:$true] %s114
          %s116 = sshll.u32 %s107, 4
          %s117 = int_to_ptr.vmem [resolvable:$true] %s116
          %122 = dma.hbm_to_vmem [thread:$0]  %s115, 64, %s117, %s104, 64, 32, 2
        $region20: #{tpu_custom_call.1} parent=15 // pred_fallthru
          _
      $region16: #{tpu_custom_call.1} parent=5 // pred_fallthru
        _
      %p123 = scmp.le.s32.totalorder 1, %s13
      %p124 = scmp.lt.s32.totalorder %s13, 3
      %p125 = pnand %p123, %p124
      %p126 = pneg %p125
      // Predicated region
      $region21: #{tpu_custom_call.1} parent=5 // pred_check
        _
      $region22: #{tpu_custom_call.1} parent=5 // pred_check_branch
        %128 = sbr.rel (%p125) target = $region24
      $region23: #{tpu_custom_call.1} parent=5 // pred_region
        %s129 = ssub.s32 %s13, 1
        %s130 = sand.u32 %s40, 1
        %s131 = scalar_lea.sflag [#allocation3], %s130
        %s132 = sand.u32 %s40, 1
        %s133 = smul.addr %s132, 4
        %s134 = scalar_lea.vmem [#allocation2], %s133
        // Predicated region
        $region25: #{tpu_custom_call.1} parent=23 // pred_check
          %p135 = pneg %p53
        $region26: #{tpu_custom_call.1} parent=23 // pred_check_branch
          %137 = sbr.rel (%p135) target = $region28
        $region27: #{tpu_custom_call.1} parent=23 // pred_region
          %139 = dma.done %s131, 64
        $region28: #{tpu_custom_call.1} parent=23 // pred_fallthru
          _
        %s140 = sand.u32 %s40, 1
        %s141 = scalar_lea.sflag [#allocation3], %s140
        %s142 = sand.u32 %s40, 1
        %s143 = smul.addr %s142, 4
        %s144 = scalar_lea.vmem [#allocation2], %s143
        %p145 = pneg %p53
        %p146 = pneg %p50
        %p147 = pneg %p81
        %p148 = pneg %p78
        %s149 = sand.u32 %s68, 1
        %s150 = scalar_lea.sflag [#allocation4], %s149
        %s151 = sand.u32 %s68, 1
        %s152 = smul.addr %s151, 2
        %s153 = scalar_lea.vmem [#allocation5], %s152
        %v154 = vld [vmem:[%s134] sm:$0x3]
        %v155 = vmul.f32 %v154, 0.5
        %v156 = vadd.f32 %v155, 0.0
        %s157 = scalar_lea.vmem %s134, 2 [#allocation2]
        %v158 = vld [vmem:[%s157] sm:$0x3]
        %v159 = vmul.f32 %v158, 0.5
        %v160 = vadd.f32 %v156, %v159
        %161 = vst [vmem:[%s153] sm:$0x3] %v160
        %s162 = sand.u32 %s68, 1
        %s163 = scalar_lea.sflag [#allocation4], %s162
        %s164 = sand.u32 %s68, 1
        %s165 = smul.addr %s164, 2
        %s166 = scalar_lea.vmem [#allocation5], %s165
        // Predicated region
        $region29: #{tpu_custom_call.1} parent=23 // pred_check
          %p167 = pneg %p78
        $region30: #{tpu_custom_call.1} parent=23 // pred_check_branch
          %169 = sbr.rel (%p167) target = $region32
        $region31: #{tpu_custom_call.1} parent=23 // pred_region
          %171 = vsyncadd %s163, 0
          %s172 = smul.addr %s22, 2
          %s173 = sadd.s32 %s23, %s172
          %s174 = smul.addr %s173, 2
          %s175 = scalar_lea.hbm %s1, %s174
          %s177 = sshll.u32 %s166, 4
          %s178 = int_to_ptr.vmem [resolvable:$true] %s177
          %s179 = sshll.u32 %s175, 4
          %s180 = int_to_ptr.hbm [resolvable:$true] %s179
          %182 = dma.vmem_to_hbm [thread:$0]  %s178, 32, %s180, %s163
        $region32: #{tpu_custom_call.1} parent=23 // pred_fallthru
          _
      $region24: #{tpu_custom_call.1} parent=5 // pred_fallthru
        _
      %p183 = scmp.le.s32.totalorder 2, %s13
      // Predicated region
      $region33: #{tpu_custom_call.1} parent=5 // pred_check
        %p184 = pneg %p183
      $region34: #{tpu_custom_call.1} parent=5 // pred_check_branch
        %186 = sbr.rel (%p184) target = $region36
      $region35: #{tpu_custom_call.1} parent=5 // pred_region
        %s187 = ssub.s32 %s13, 2
        // Predicated region
        $region37: #{tpu_custom_call.1} parent=35 // pred_check
          %p188 = pneg %p84
        $region38: #{tpu_custom_call.1} parent=35 // pred_check_branch
          %190 = sbr.rel (%p188) target = $region40
        $region39: #{tpu_custom_call.1} parent=35 // pred_region
          %s191 = sand.u32 %s69, 1
          %s192 = scalar_lea.sflag [#allocation4], %s191
          %s193 = sand.u32 %s69, 1
          %s194 = smul.addr %s193, 2
          %s195 = scalar_lea.vmem [#allocation5], %s194
          %197 = dma.done %s192, 32
        $region40: #{tpu_custom_call.1} parent=35 // pred_fallthru
          _
      $region36: #{tpu_custom_call.1} parent=5 // pred_fallthru
        _
    $region6: #{tpu_custom_call.1} parent=1 // loop_footer
      %s17 = sadd.s32 1, %s13
    $region7: #{tpu_custom_call.1} parent=1 // loop_footer_branch
      %12 = sbr.rel target = $region3
    $region8: #{tpu_custom_call.1} parent=1 // loop_exit
      _
    %198 = vsyncpa [#allocation3], 1
    %s199 = scalar_lea.sflag [#allocation3], 1
    %200 = vsyncpa %s199, 1
    %201 = vsyncpa [#allocation4], 1
    %s202 = scalar_lea.sflag [#allocation4], 1
    %203 = vsyncpa %s202, 1

</llo_original>
